<compile_context>
chip_gen: v6e
topology: v6e:2x2x1
jax: 0.10.0
libtpu: 0.0.40
codegen_flags: <defaults>
</compile_context>

<pallas_src>
import jax
import jax.numpy as jnp
from jax.experimental import pallas as pl
from jax.experimental.pallas import tpu as pltpu


LANE = 128      # TPU lane width (last dim)
SUBLANE = 8     # TPU sublane width (second-to-last dim)


def _round_up(x, m):
    return ((x + m - 1) // m) * m


# ------------------------------ fused kernel ------------------------------- #

def _make_fused_mlp_kernel(layer_modes):
    """layer_modes: tuple of 'plain' | 'relu' | 'residual_relu', one per layer."""

    def kernel(x_ref, w_ref, b_ref, o_ref):
        # Activation stays resident on-chip for the entire layer stack.
        h = x_ref[...].astype(jnp.float32)
        # L is small and static -> Python loop is fully unrolled at trace time.
        for l, mode in enumerate(layer_modes):
            w = w_ref[l]            # (F, F)  weights resident in VMEM
            b = b_ref[l]            # (1, F)  bias loaded once per layer
            y = jnp.dot(h, w, preferred_element_type=jnp.float32) + b
            if mode == "residual_relu":
                y = jnp.maximum(y + h, 0.0)     # relu(Wx + b + x)
            elif mode == "relu":
                y = jnp.maximum(y, 0.0)         # relu(Wx + b)
            # "plain": no activation
            h = y
        o_ref[...] = h.astype(o_ref.dtype)

    return kernel


def fused_mlp_pallas(x_pad, w_stack, b_stack, layer_modes, tile_b):
    """x_pad: (B_pad, F) f32; w_stack: (L, F, F) f32; b_stack: (L, 1, F) f32."""
    b_pad, f = x_pad.shape
    n_layers = w_stack.shape[0]
    assert b_pad % tile_b == 0
    kernel = _make_fused_mlp_kernel(layer_modes)
    return pl.pallas_call(
        kernel,
        out_shape=jax.ShapeDtypeStruct((b_pad, f), jnp.float32),
        grid=(b_pad // tile_b,),
        in_specs=[
            pl.BlockSpec((tile_b, f), lambda i: (i, 0)),            # activations
            pl.BlockSpec((n_layers, f, f), lambda i: (0, 0, 0)),    # weights (resident)
            pl.BlockSpec((n_layers, 1, f), lambda i: (0, 0, 0)),    # biases  (resident)
        ],
        out_specs=pl.BlockSpec((tile_b, f), lambda i: (i, 0)),
        compiler_params=pltpu.CompilerParams(
            dimension_semantics=("parallel",),   # batch axis -> both TCs on v7x
        ),
    )(x_pad, w_stack, b_stack)


# -------------------------- parameter construction ------------------------- #

def init_linear_params(key, f_in, f_out):
    """Deterministic init, similar scale to PyTorch's default (uniform +-1/sqrt(fan_in))."""
    kw, kb = jax.random.split(key)
    bound = 1.0 / jnp.sqrt(jnp.float32(f_in))
    w = jax.random.uniform(kw, (f_in, f_out), jnp.float32, -bound, bound)
    b = jax.random.uniform(kb, (f_out,), jnp.float32, -bound, bound)
    return w, b


def init_fpmlp_layers(key, args):
    """Returns the layer stack as a list of (w, b, mode), unpadded, in forward order."""
    fp_dim = args["fp_dim"]
    hidden = args["hidden_dim"]
    n_mlp = args["N_MLP_layer"]
    n_pred = args["N_predictor_layer"]
    n_props = args["N_properties"]

    keys = jax.random.split(key, 1 + n_mlp + n_pred)
    layers = []
    w, b = init_linear_params(keys[0], fp_dim, hidden)
    layers.append((w, b, "plain"))                            # embedding
    for i in range(n_mlp):
        w, b = init_linear_params(keys[1 + i], hidden, hidden)
        layers.append((w, b, "residual_relu"))                # MLP residual blocks
    for i in range(n_pred - 1):
        w, b = init_linear_params(keys[1 + n_mlp + i], hidden, hidden)
        layers.append((w, b, "relu"))                         # predictor hidden
    w, b = init_linear_params(keys[n_mlp + n_pred], hidden, n_props)
    layers.append((w, b, "plain"))                            # output head
    return layers


def pack_layers(layers):
    """Zero-pad every layer to a common lane-aligned width F and stack them."""
    dims = [layers[0][0].shape[0]] + [w.shape[1] for (w, _, _) in layers]
    f = max(_round_up(d, LANE) for d in dims)
    w_stack, b_stack, modes = [], [], []
    for (w, b, mode) in layers:
        f_in, f_out = w.shape
        wp = jnp.zeros((f, f), jnp.float32).at[:f_in, :f_out].set(w)
        bp = jnp.zeros((1, f), jnp.float32).at[0, :f_out].set(b)
        w_stack.append(wp)
        b_stack.append(bp)
        modes.append(mode)
    return jnp.stack(w_stack), jnp.stack(b_stack), tuple(modes), f


# ------------------------------- forward pass ------------------------------ #

def fpmlp_forward(packed, x, n_properties):
    w_stack, b_stack, modes, f = packed
    batch, fp_dim = x.shape
    # Batch tile: large enough to amortize per-grid-step overhead, small enough
    # that double-buffered (TB, F) x/out tiles + resident weights fit VMEM on v7x.
    tile_b = 256 if batch >= 256 else _round_up(batch, SUBLANE)
    b_pad = _round_up(batch, tile_b)
    x_pad = jnp.zeros((b_pad, f), jnp.float32).at[:batch, :fp_dim].set(x)
    out_pad = fused_mlp_pallas(x_pad, w_stack, b_stack, modes, tile_b)
    return out_pad[:batch, :n_properties]


# -------------------------------- reference -------------------------------- #

def fpmlp_forward_ref(layers, x):
    for (w, b, mode) in layers:
        y = x @ w + b
        if mode == "residual_relu":
            y = jnp.maximum(y + x, 0.0)
        elif mode == "relu":
            y = jnp.maximum(y, 0.0)
        x = y
    return x


# ----------------------------------- main ----------------------------------- #

if __name__ == "__main__":
    args = {
        "fp_dim": 64,
        "hidden_dim": 32,
        "N_MLP_layer": 2,
        "N_predictor_layer": 2,
        "N_properties": 3,
        "dropout": 0.1,   # identity in inference
    }

    key = jax.random.PRNGKey(0)
    k_params, k_x = jax.random.split(key)

    layers = init_fpmlp_layers(k_params, args)
    packed = pack_layers(layers)

    batch = 2
    x = jax.random.normal(k_x, (batch, args["fp_dim"]), jnp.float32)

    out = fpmlp_forward(packed, x, args["N_properties"])
    out = jax.block_until_ready(out)

    ref = fpmlp_forward_ref(layers, x)
    assert out.shape == (batch, args["N_properties"]), out.shape
    assert jnp.allclose(out, ref, atol=1e-5, rtol=1e-5), "mismatch vs reference"

    print("KERNEL_OK")
</pallas_src>

<mosaic_0001>
module attributes {stable_mosaic.version = 11 : i64} {
  func.func @kernel(%arg0: i32, %arg1: memref<8x128xf32, #tpu.memory_space<vmem>>, %arg2: memref<5x128x128xf32, #tpu.memory_space<vmem>>, %arg3: memref<5x1x128xf32, #tpu.memory_space<vmem>>, %arg4: memref<8x128xf32, #tpu.memory_space<vmem>>) attributes {dimension_semantics = [#tpu.dimension_semantics<parallel>], iteration_bounds = array<i64: 1>, scalar_prefetch = 0 : i64, scratch_operands = 0 : i64, tpu.core_type = #tpu.core_type<tc>, window_params = [{transform_indices = @transform_0, window_bounds = array<i64: 8, 128>}, {pipeline_mode = #tpu.pipeline_mode<synchronous>, transform_indices = @transform_1, window_bounds = array<i64: 5, 128, 128>}, {pipeline_mode = #tpu.pipeline_mode<synchronous>, transform_indices = @transform_2, window_bounds = array<i64: 5, 1, 128>}, {transform_indices = @transform_3, window_bounds = array<i64: 8, 128>}]} {
    %c0 = arith.constant 0 : index
    %c0_0 = arith.constant 0 : index
    %0 = vector.load %arg1[%c0, %c0_0] : memref<8x128xf32, #tpu.memory_space<vmem>>, vector<8x128xf32>
    %c0_1 = arith.constant 0 : index
    %c0_2 = arith.constant 0 : index
    %c0_3 = arith.constant 0 : index
    %1 = vector.load %arg2[%c0_1, %c0_2, %c0_3] : memref<5x128x128xf32, #tpu.memory_space<vmem>>, vector<1x128x128xf32>
    %2 = vector.shape_cast %1 : vector<1x128x128xf32> to vector<128x128xf32>
    %c0_4 = arith.constant 0 : index
    %c0_5 = arith.constant 0 : index
    %c0_6 = arith.constant 0 : index
    %3 = vector.load %arg3[%c0_4, %c0_5, %c0_6] : memref<5x1x128xf32, #tpu.memory_space<vmem>>, vector<1x1x128xf32>
    %4 = vector.shape_cast %3 : vector<1x1x128xf32> to vector<1x128xf32>
    %cst = arith.constant dense<0.000000e+00> : vector<8x128xf32>
    %5 = tpu.matmul %0, %2, %cst {dimension_numbers = #tpu.dot_dimension_numbers<[1], [0], [0], [1], [0, 0, 1, 1], [], []>} : vector<8x128xf32>, vector<128x128xf32>, vector<8x128xf32> -> vector<8x128xf32>
    %6 = vector.broadcast %4 : vector<1x128xf32> to vector<8x128xf32>
    %7 = arith.addf %5, %6 : vector<8x128xf32>
    %c1 = arith.constant 1 : index
    %c0_7 = arith.constant 0 : index
    %c0_8 = arith.constant 0 : index
    %8 = vector.load %arg2[%c1, %c0_7, %c0_8] : memref<5x128x128xf32, #tpu.memory_space<vmem>>, vector<1x128x128xf32>
    %9 = vector.shape_cast %8 : vector<1x128x128xf32> to vector<128x128xf32>
    %c1_9 = arith.constant 1 : index
    %c0_10 = arith.constant 0 : index
    %c0_11 = arith.constant 0 : index
    %10 = vector.load %arg3[%c1_9, %c0_10, %c0_11] : memref<5x1x128xf32, #tpu.memory_space<vmem>>, vector<1x1x128xf32>
    %11 = vector.shape_cast %10 : vector<1x1x128xf32> to vector<1x128xf32>
    %cst_12 = arith.constant dense<0.000000e+00> : vector<8x128xf32>
    %12 = tpu.matmul %7, %9, %cst_12 {dimension_numbers = #tpu.dot_dimension_numbers<[1], [0], [0], [1], [0, 0, 1, 1], [], []>} : vector<8x128xf32>, vector<128x128xf32>, vector<8x128xf32> -> vector<8x128xf32>
    %13 = vector.broadcast %11 : vector<1x128xf32> to vector<8x128xf32>
    %14 = arith.addf %12, %13 : vector<8x128xf32>
    %15 = arith.addf %14, %7 : vector<8x128xf32>
    %cst_13 = arith.constant 0.000000e+00 : f32
    %16 = vector.broadcast %cst_13 : f32 to vector<8x128xf32>
    %17 = arith.maximumf %15, %16 : vector<8x128xf32>
    %c2 = arith.constant 2 : index
    %c0_14 = arith.constant 0 : index
    %c0_15 = arith.constant 0 : index
    %18 = vector.load %arg2[%c2, %c0_14, %c0_15] : memref<5x128x128xf32, #tpu.memory_space<vmem>>, vector<1x128x128xf32>
    %19 = vector.shape_cast %18 : vector<1x128x128xf32> to vector<128x128xf32>
    %c2_16 = arith.constant 2 : index
    %c0_17 = arith.constant 0 : index
    %c0_18 = arith.constant 0 : index
    %20 = vector.load %arg3[%c2_16, %c0_17, %c0_18] : memref<5x1x128xf32, #tpu.memory_space<vmem>>, vector<1x1x128xf32>
    %21 = vector.shape_cast %20 : vector<1x1x128xf32> to vector<1x128xf32>
    %cst_19 = arith.constant dense<0.000000e+00> : vector<8x128xf32>
    %22 = tpu.matmul %17, %19, %cst_19 {dimension_numbers = #tpu.dot_dimension_numbers<[1], [0], [0], [1], [0, 0, 1, 1], [], []>} : vector<8x128xf32>, vector<128x128xf32>, vector<8x128xf32> -> vector<8x128xf32>
    %23 = vector.broadcast %21 : vector<1x128xf32> to vector<8x128xf32>
    %24 = arith.addf %22, %23 : vector<8x128xf32>
    %25 = arith.addf %24, %17 : vector<8x128xf32>
    %cst_20 = arith.constant 0.000000e+00 : f32
    %26 = vector.broadcast %cst_20 : f32 to vector<8x128xf32>
    %27 = arith.maximumf %25, %26 : vector<8x128xf32>
    %c3 = arith.constant 3 : index
    %c0_21 = arith.constant 0 : index
    %c0_22 = arith.constant 0 : index
    %28 = vector.load %arg2[%c3, %c0_21, %c0_22] : memref<5x128x128xf32, #tpu.memory_space<vmem>>, vector<1x128x128xf32>
    %29 = vector.shape_cast %28 : vector<1x128x128xf32> to vector<128x128xf32>
    %c3_23 = arith.constant 3 : index
    %c0_24 = arith.constant 0 : index
    %c0_25 = arith.constant 0 : index
    %30 = vector.load %arg3[%c3_23, %c0_24, %c0_25] : memref<5x1x128xf32, #tpu.memory_space<vmem>>, vector<1x1x128xf32>
    %31 = vector.shape_cast %30 : vector<1x1x128xf32> to vector<1x128xf32>
    %cst_26 = arith.constant dense<0.000000e+00> : vector<8x128xf32>
    %32 = tpu.matmul %27, %29, %cst_26 {dimension_numbers = #tpu.dot_dimension_numbers<[1], [0], [0], [1], [0, 0, 1, 1], [], []>} : vector<8x128xf32>, vector<128x128xf32>, vector<8x128xf32> -> vector<8x128xf32>
    %33 = vector.broadcast %31 : vector<1x128xf32> to vector<8x128xf32>
    %34 = arith.addf %32, %33 : vector<8x128xf32>
    %cst_27 = arith.constant 0.000000e+00 : f32
    %35 = vector.broadcast %cst_27 : f32 to vector<8x128xf32>
    %36 = arith.maximumf %34, %35 : vector<8x128xf32>
    %c4 = arith.constant 4 : index
    %c0_28 = arith.constant 0 : index
    %c0_29 = arith.constant 0 : index
    %37 = vector.load %arg2[%c4, %c0_28, %c0_29] : memref<5x128x128xf32, #tpu.memory_space<vmem>>, vector<1x128x128xf32>
    %38 = vector.shape_cast %37 : vector<1x128x128xf32> to vector<128x128xf32>
    %c4_30 = arith.constant 4 : index
    %c0_31 = arith.constant 0 : index
    %c0_32 = arith.constant 0 : index
    %39 = vector.load %arg3[%c4_30, %c0_31, %c0_32] : memref<5x1x128xf32, #tpu.memory_space<vmem>>, vector<1x1x128xf32>
    %40 = vector.shape_cast %39 : vector<1x1x128xf32> to vector<1x128xf32>
    %cst_33 = arith.constant dense<0.000000e+00> : vector<8x128xf32>
    %41 = tpu.matmul %36, %38, %cst_33 {dimension_numbers = #tpu.dot_dimension_numbers<[1], [0], [0], [1], [0, 0, 1, 1], [], []>} : vector<8x128xf32>, vector<128x128xf32>, vector<8x128xf32> -> vector<8x128xf32>
    %42 = vector.broadcast %40 : vector<1x128xf32> to vector<8x128xf32>
    %43 = arith.addf %41, %42 : vector<8x128xf32>
    %c0_34 = arith.constant 0 : index
    %c0_35 = arith.constant 0 : index
    %44 = vector.load %arg4[%c0_34, %c0_35] : memref<8x128xf32, #tpu.memory_space<vmem>>, vector<8x128xf32>
    tpu.vector_store %arg4[%c0_34, %c0_35], %43 {strides = array<i32>} : memref<8x128xf32, #tpu.memory_space<vmem>>, vector<8x128xf32>,
    return
  }
  func.func @transform_0(%arg0: i32) -> (i32, i32) {
    %c0_i32 = arith.constant 0 : i32
    %c0_i32_0 = arith.constant 0 : i32
    return %arg0, %c0_i32 : i32, i32
  }
  func.func @transform_1(%arg0: i32) -> (i32, i32, i32) {
    %c0_i32 = arith.constant 0 : i32
    %c0_i32_0 = arith.constant 0 : i32
    %c0_i32_1 = arith.constant 0 : i32
    %c0_i32_2 = arith.constant 0 : i32
    return %c0_i32, %c0_i32_0, %c0_i32_1 : i32, i32, i32
  }
  func.func @transform_2(%arg0: i32) -> (i32, i32, i32) {
    %c0_i32 = arith.constant 0 : i32
    %c0_i32_0 = arith.constant 0 : i32
    %c0_i32_1 = arith.constant 0 : i32
    %c0_i32_2 = arith.constant 0 : i32
    return %c0_i32, %c0_i32_0, %c0_i32_1 : i32, i32, i32
  }
  func.func @transform_3(%arg0: i32) -> (i32, i32) {
    %c0_i32 = arith.constant 0 : i32
    %c0_i32_0 = arith.constant 0 : i32
    return %arg0, %c0_i32 : i32, i32
  }
}

</mosaic_0001>

<llo_original>
// kernel: tpu_custom_call.1
$region0: #{tpu_custom_call.1}
  #allocation0 [shape = 'u32[]', space=smem, size = 0x4, offset = 0x4, fixed_abs, tag = 'smem constant byte address 0x4 - core index']
  #allocation1 [shape = 'u32[144,128]{1,0:T(1,128)}', space=vmem, size = 0x12000, scoped, tag = 'internal scratch']
  %s0 = inlined_call_operand.hbm [shape: f32[8,128], index: 0, kind: input, shape index: {}]
  %s1 = inlined_call_operand.hbm [shape: f32[5,128,128], index: 1, kind: input, shape index: {}]
  %s2 = inlined_call_operand.hbm [shape: f32[5,1,128], index: 2, kind: input, shape index: {}]
  %s3 = inlined_call_operand.hbm [shape: f32[8,128], index: 3, kind: output, shape index: {}]
  %s4 = sld [smem:[#allocation0]]
  $region34: #{tpu_custom_call.1} parent=0
    _
  %s6 = ssub.s32 1, %s4
  %s7 = scalar_select 0, %s6, %s4
  $region1: #{tpu_custom_call.1} parent=0
    #allocation2 [shape = 'u8[4096]{0}', space=vmem, size = 0x1000, scoped, tag = 'input window, operand 0, single buffered']
    #allocation3 [shape = 's32[1]{0}', space=sflag, size = 0x4, scoped, tag = 'scoped memory for tpu_custom_call.1']
    #allocation4 [shape = 's32[1]{0}', space=sflag, size = 0x4, scoped, tag = 'scoped memory for tpu_custom_call.1']
    #allocation5 [shape = 'u8[327680]{0}', space=vmem, size = 0x50000, scoped, tag = 'input window, operand 1, single buffered']
    #allocation6 [shape = 's32[1]{0}', space=sflag, size = 0x4, scoped, tag = 'scoped memory for tpu_custom_call.1']
    #allocation7 [shape = 'u8[2560]{0}', space=vmem, size = 0xc00, scoped, tag = 'input window, operand 2, single buffered']
    #allocation8 [shape = 'u8[4096]{0}', space=vmem, size = 0x1000, scoped, tag = 'output window, operand 0, single buffered']
    %8 = vsyncpa [#allocation3], 0
    %9 = vsyncpa [#allocation6], 0
    %10 = vsyncpa [#allocation4], 0
    // Predicated region
    $region2: #{tpu_custom_call.1} parent=1 // pred_check
      _
    $region3: #{tpu_custom_call.1} parent=1 // pred_check_branch
      %12 = sbr.rel (0) target = $region5
    $region4: #{tpu_custom_call.1} parent=1 // pred_region
      %s14 = ssub.s32 128, 128
      %15 = vsyncadd [#allocation3], %s14
      %s17 = sshll.u32 [#allocation2], 4
      %s18 = int_to_ptr.vmem [resolvable:$true] %s17
      %20 = dma.hbm_to_vmem [thread:$0]  %s0, 128, %s18, [#allocation3]
    $region5: #{tpu_custom_call.1} parent=1 // pred_fallthru
      _
    // Predicated region
    $region6: #{tpu_custom_call.1} parent=1 // pred_check
      _
    $region7: #{tpu_custom_call.1} parent=1 // pred_check_branch
      %22 = sbr.rel (0) target = $region9
    $region8: #{tpu_custom_call.1} parent=1 // pred_region
      %s24 = ssub.s32 10240, 10240
      %25 = vsyncadd [#allocation6], %s24
      %s26 = sshll.u32 [#allocation5], 4
      %s27 = int_to_ptr.vmem [resolvable:$true] %s26
      %32 = dma.hbm_to_vmem [thread:$0]  %s1, 10240, %s27, [#allocation6], 128, 128, 8
    $region9: #{tpu_custom_call.1} parent=1 // pred_fallthru
      _
    // Predicated region
    $region10: #{tpu_custom_call.1} parent=1 // pred_check
      _
    $region11: #{tpu_custom_call.1} parent=1 // pred_check_branch
      %34 = sbr.rel (0) target = $region13
    $region12: #{tpu_custom_call.1} parent=1 // pred_region
      %s36 = ssub.s32 80, 80
      %37 = vsyncadd [#allocation6], %s36
      %s38 = sshll.u32 [#allocation7], 4
      %s39 = int_to_ptr.vmem [resolvable:$true] %s38
      %44 = dma.hbm_to_vmem [thread:$0]  %s2, 80, %s39, [#allocation6], 16, 16, 1
    $region13: #{tpu_custom_call.1} parent=1 // pred_fallthru
      _
    // Predicated region
    $region14: #{tpu_custom_call.1} parent=1 // pred_check
      _
    $region15: #{tpu_custom_call.1} parent=1 // pred_check_branch
      %46 = sbr.rel (0) target = $region17
    $region16: #{tpu_custom_call.1} parent=1 // pred_region
      %47 = dma.done [#allocation3], 128
    $region17: #{tpu_custom_call.1} parent=1 // pred_fallthru
      _
    // Predicated region
    $region18: #{tpu_custom_call.1} parent=1 // pred_check
      _
    $region19: #{tpu_custom_call.1} parent=1 // pred_check_branch
      %49 = sbr.rel (0) target = $region21
    $region20: #{tpu_custom_call.1} parent=1 // pred_region
      %50 = dma.done [#allocation6], 10240
    $region21: #{tpu_custom_call.1} parent=1 // pred_fallthru
      _
    // Predicated region
    $region22: #{tpu_custom_call.1} parent=1 // pred_check
      _
    $region23: #{tpu_custom_call.1} parent=1 // pred_check_branch
      %52 = sbr.rel (0) target = $region25
    $region24: #{tpu_custom_call.1} parent=1 // pred_region
      %53 = dma.done [#allocation6], 80
    $region25: #{tpu_custom_call.1} parent=1 // pred_fallthru
      _
    %v54 = vld [vmem:[#allocation2] sm:$0xff]
    %v55 = vld [vmem:[#allocation5] sm:$0xff]
    %v56 = vld [vmem:[#allocation5 + $0x8] sm:$0xff]
    %v57 = vld [vmem:[#allocation5 + $0x10] sm:$0xff]
    %v58 = vld [vmem:[#allocation5 + $0x18] sm:$0xff]
    %v59 = vld [vmem:[#allocation5 + $0x20] sm:$0xff]
    %v60 = vld [vmem:[#allocation5 + $0x28] sm:$0xff]
    %v61 = vld [vmem:[#allocation5 + $0x30] sm:$0xff]
    %v62 = vld [vmem:[#allocation5 + $0x38] sm:$0xff]
    %v63 = vld [vmem:[#allocation5 + $0x40] sm:$0xff]
    %v64 = vld [vmem:[#allocation5 + $0x48] sm:$0xff]
    %v65 = vld [vmem:[#allocation5 + $0x50] sm:$0xff]
    %v66 = vld [vmem:[#allocation5 + $0x58] sm:$0xff]
    %v67 = vld [vmem:[#allocation5 + $0x60] sm:$0xff]
    %v68 = vld [vmem:[#allocation5 + $0x68] sm:$0xff]
    %v69 = vld [vmem:[#allocation5 + $0x70] sm:$0xff]
    %v70 = vld [vmem:[#allocation5 + $0x78] sm:$0xff]
    %v71 = vld [vmem:[#allocation7] sm:$0x1]
    %v73 = vlaneseq
    %v74 = vshrl.u32 %v73, 7
    %v75 = vsub.s32 0, %v74
    %v76 = vrot.slane %v71, %v75
    %78 = vmatprep.subr.mxu0 0.0
    %79 = vmatpush1.msra.mxu0 %v70
    %80 = vmatprep.subr.mxu0 0.0
    %81 = vmatpush1.msra.mxu0 %v69
    %82 = vmatprep.subr.mxu0 0.0
    %83 = vmatpush1.msra.mxu0 %v68
    %84 = vmatprep.subr.mxu0 0.0
    %85 = vmatpush1.msra.mxu0 %v67
    %86 = vmatprep.subr.mxu0 0.0
    %87 = vmatpush1.msra.mxu0 %v66
    %88 = vmatprep.subr.mxu0 0.0
    %89 = vmatpush1.msra.mxu0 %v65
    %90 = vmatprep.subr.mxu0 0.0
    %91 = vmatpush1.msra.mxu0 %v64
    %92 = vmatprep.subr.mxu0 0.0
    %93 = vmatpush1.msra.mxu0 %v63
    %94 = vmatprep.subr.mxu0 0.0
    %95 = vmatpush1.msra.mxu0 %v62
    %96 = vmatprep.subr.mxu0 0.0
    %97 = vmatpush1.msra.mxu0 %v61
    %98 = vmatprep.subr.mxu0 0.0
    %99 = vmatpush1.msra.mxu0 %v60
    %100 = vmatprep.subr.mxu0 0.0
    %101 = vmatpush1.msra.mxu0 %v59
    %102 = vmatprep.subr.mxu0 0.0
    %103 = vmatpush1.msra.mxu0 %v58
    %104 = vmatprep.subr.mxu0 0.0
    %105 = vmatpush1.msra.mxu0 %v57
    %106 = vmatprep.subr.mxu0 0.0
    %107 = vmatpush1.msra.mxu0 %v56
    %108 = vmatprep.subr.mxu0 0.0
    %109 = vmatpush1.msra.mxu0 %v55
    %110 = vmatprep.subr.mxu0 0.0
    %111 = vmatpush2.msra.mxu0 0.0
    %112 = vmatprep.subr.mxu0 0.0
    %113 = vmatpush2.msra.mxu0 0.0
    %114 = vmatprep.subr.mxu0 0.0
    %115 = vmatpush2.msra.mxu0 0.0
    %116 = vmatprep.subr.mxu0 0.0
    %117 = vmatpush2.msra.mxu0 0.0
    %118 = vmatprep.subr.mxu0 0.0
    %119 = vmatpush2.msra.mxu0 0.0
    %120 = vmatprep.subr.mxu0 0.0
    %121 = vmatpush2.msra.mxu0 0.0
    %122 = vmatprep.subr.mxu0 0.0
    %123 = vmatpush2.msra.mxu0 0.0
    %124 = vmatprep.subr.mxu0 0.0
    %125 = vmatpush2.msra.mxu0 0.0
    %126 = vmatprep.subr.mxu0 0.0
    %127 = vmatpush2.msra.mxu0 0.0
    %128 = vmatprep.subr.mxu0 0.0
    %129 = vmatpush2.msra.mxu0 0.0
    %130 = vmatprep.subr.mxu0 0.0
    %131 = vmatpush2.msra.mxu0 0.0
    %132 = vmatprep.subr.mxu0 0.0
    %133 = vmatpush2.msra.mxu0 0.0
    %134 = vmatprep.subr.mxu0 0.0
    %135 = vmatpush2.msra.mxu0 0.0
    %136 = vmatprep.subr.mxu0 0.0
    %137 = vmatpush2.msra.mxu0 0.0
    %138 = vmatprep.subr.mxu0 0.0
    %139 = vmatpush2.msra.mxu0 0.0
    %140 = vmatprep.subr.mxu0 0.0
    %141 = vmatpush2.msra.mxu0 0.0
    %142 = vmatprep.mubr.f32.mxu0 0.0
    %143 = vmatmul.mubr.f32.gmra.mxu0 %v54
    %v144 = vpop.f32.mrf.mxu0
    %v145 = vadd.f32 %v76, %v144
    %v146 = vpop.f32.mrf.mxu0
    %147 = vdwg.mxu0
    %s148 = scalar_lea.vmem [#allocation5], 128
    %v149 = vld [vmem:[%s148] sm:$0xff]
    %v150 = vld [vmem:[%s148 + $0x8] sm:$0xff]
    %v151 = vld [vmem:[%s148 + $0x10] sm:$0xff]
    %v152 = vld [vmem:[%s148 + $0x18] sm:$0xff]
    %v153 = vld [vmem:[%s148 + $0x20] sm:$0xff]
    %v154 = vld [vmem:[%s148 + $0x28] sm:$0xff]
    %v155 = vld [vmem:[%s148 + $0x30] sm:$0xff]
    %v156 = vld [vmem:[%s148 + $0x38] sm:$0xff]
    %v157 = vld [vmem:[%s148 + $0x40] sm:$0xff]
    %v158 = vld [vmem:[%s148 + $0x48] sm:$0xff]
    %v159 = vld [vmem:[%s148 + $0x50] sm:$0xff]
    %v160 = vld [vmem:[%s148 + $0x58] sm:$0xff]
    %v161 = vld [vmem:[%s148 + $0x60] sm:$0xff]
    %v162 = vld [vmem:[%s148 + $0x68] sm:$0xff]
    %v163 = vld [vmem:[%s148 + $0x70] sm:$0xff]
    %v164 = vld [vmem:[%s148 + $0x78] sm:$0xff]
    %s165 = scalar_lea.vmem [#allocation7], 1
    %v166 = vld [vmem:[%s165] sm:$0x1]
    %v168 = vlaneseq
    %v169 = vshrl.u32 %v168, 7
    %v170 = vsub.s32 0, %v169
    %v171 = vrot.slane %v166, %v170
    %173 = vmatprep.subr.mxu0 0.0
    %174 = vmatpush1.msra.mxu0 %v164
    %175 = vmatprep.subr.mxu0 0.0
    %176 = vmatpush1.msra.mxu0 %v163
    %177 = vmatprep.subr.mxu0 0.0
    %178 = vmatpush1.msra.mxu0 %v162
    %179 = vmatprep.subr.mxu0 0.0
    %180 = vmatpush1.msra.mxu0 %v161
    %181 = vmatprep.subr.mxu0 0.0
    %182 = vmatpush1.msra.mxu0 %v160
    %183 = vmatprep.subr.mxu0 0.0
    %184 = vmatpush1.msra.mxu0 %v159
    %185 = vmatprep.subr.mxu0 0.0
    %186 = vmatpush1.msra.mxu0 %v158
    %187 = vmatprep.subr.mxu0 0.0
    %188 = vmatpush1.msra.mxu0 %v157
    %189 = vmatprep.subr.mxu0 0.0
    %190 = vmatpush1.msra.mxu0 %v156
    %191 = vmatprep.subr.mxu0 0.0
    %192 = vmatpush1.msra.mxu0 %v155
    %193 = vmatprep.subr.mxu0 0.0
    %194 = vmatpush1.msra.mxu0 %v154
    %195 = vmatprep.subr.mxu0 0.0
    %196 = vmatpush1.msra.mxu0 %v153
    %197 = vmatprep.subr.mxu0 0.0
    %198 = vmatpush1.msra.mxu0 %v152
    %199 = vmatprep.subr.mxu0 0.0
    %200 = vmatpush1.msra.mxu0 %v151
    %201 = vmatprep.subr.mxu0 0.0
    %202 = vmatpush1.msra.mxu0 %v150
    %203 = vmatprep.subr.mxu0 0.0
    %204 = vmatpush1.msra.mxu0 %v149
    %205 = vmatprep.subr.mxu0 0.0
    %206 = vmatpush2.msra.mxu0 0.0
    %207 = vmatprep.subr.mxu0 0.0
    %208 = vmatpush2.msra.mxu0 0.0
    %209 = vmatprep.subr.mxu0 0.0
    %210 = vmatpush2.msra.mxu0 0.0
    %211 = vmatprep.subr.mxu0 0.0
    %212 = vmatpush2.msra.mxu0 0.0
    %213 = vmatprep.subr.mxu0 0.0
    %214 = vmatpush2.msra.mxu0 0.0
    %215 = vmatprep.subr.mxu0 0.0
    %216 = vmatpush2.msra.mxu0 0.0
    %217 = vmatprep.subr.mxu0 0.0
    %218 = vmatpush2.msra.mxu0 0.0
    %219 = vmatprep.subr.mxu0 0.0
    %220 = vmatpush2.msra.mxu0 0.0
    %221 = vmatprep.subr.mxu0 0.0
    %222 = vmatpush2.msra.mxu0 0.0
    %223 = vmatprep.subr.mxu0 0.0
    %224 = vmatpush2.msra.mxu0 0.0
    %225 = vmatprep.subr.mxu0 0.0
    %226 = vmatpush2.msra.mxu0 0.0
    %227 = vmatprep.subr.mxu0 0.0
    %228 = vmatpush2.msra.mxu0 0.0
    %229 = vmatprep.subr.mxu0 0.0
    %230 = vmatpush2.msra.mxu0 0.0
    %231 = vmatprep.subr.mxu0 0.0
    %232 = vmatpush2.msra.mxu0 0.0
    %233 = vmatprep.subr.mxu0 0.0
    %234 = vmatpush2.msra.mxu0 0.0
    %235 = vmatprep.subr.mxu0 0.0
    %236 = vmatpush2.msra.mxu0 0.0
    %237 = vmatprep.mubr.f32.mxu0 0.0
    %238 = vmatmul.mubr.f32.gmra.mxu0 %v145
    %v239 = vpop.f32.mrf.mxu0
    %v240 = vadd.f32 %v171, %v239
    %v241 = vpop.f32.mrf.mxu0
    %242 = vdwg.mxu0
    %v243 = vadd.f32 %v240, %v145
    %v244 = vmax.f32 %v243, 0.0
    %s245 = scalar_lea.vmem [#allocation5], 256
    %v246 = vld [vmem:[%s245] sm:$0xff]
    %v247 = vld [vmem:[%s245 + $0x8] sm:$0xff]
    %v248 = vld [vmem:[%s245 + $0x10] sm:$0xff]
    %v249 = vld [vmem:[%s245 + $0x18] sm:$0xff]
    %v250 = vld [vmem:[%s245 + $0x20] sm:$0xff]
    %v251 = vld [vmem:[%s245 + $0x28] sm:$0xff]
    %v252 = vld [vmem:[%s245 + $0x30] sm:$0xff]
    %v253 = vld [vmem:[%s245 + $0x38] sm:$0xff]
    %v254 = vld [vmem:[%s245 + $0x40] sm:$0xff]
    %v255 = vld [vmem:[%s245 + $0x48] sm:$0xff]
    %v256 = vld [vmem:[%s245 + $0x50] sm:$0xff]
    %v257 = vld [vmem:[%s245 + $0x58] sm:$0xff]
    %v258 = vld [vmem:[%s245 + $0x60] sm:$0xff]
    %v259 = vld [vmem:[%s245 + $0x68] sm:$0xff]
    %v260 = vld [vmem:[%s245 + $0x70] sm:$0xff]
    %v261 = vld [vmem:[%s245 + $0x78] sm:$0xff]
    %s262 = scalar_lea.vmem [#allocation7], 2
    %v263 = vld [vmem:[%s262] sm:$0x1]
    %v265 = vlaneseq
    %v266 = vshrl.u32 %v265, 7
    %v267 = vsub.s32 0, %v266
    %v268 = vrot.slane %v263, %v267
    %270 = vmatprep.subr.mxu0 0.0
    %271 = vmatpush1.msra.mxu0 %v261
    %272 = vmatprep.subr.mxu0 0.0
    %273 = vmatpush1.msra.mxu0 %v260
    %274 = vmatprep.subr.mxu0 0.0
    %275 = vmatpush1.msra.mxu0 %v259
    %276 = vmatprep.subr.mxu0 0.0
    %277 = vmatpush1.msra.mxu0 %v258
    %278 = vmatprep.subr.mxu0 0.0
    %279 = vmatpush1.msra.mxu0 %v257
    %280 = vmatprep.subr.mxu0 0.0
    %281 = vmatpush1.msra.mxu0 %v256
    %282 = vmatprep.subr.mxu0 0.0
    %283 = vmatpush1.msra.mxu0 %v255
    %284 = vmatprep.subr.mxu0 0.0
    %285 = vmatpush1.msra.mxu0 %v254
    %286 = vmatprep.subr.mxu0 0.0
    %287 = vmatpush1.msra.mxu0 %v253
    %288 = vmatprep.subr.mxu0 0.0
    %289 = vmatpush1.msra.mxu0 %v252
    %290 = vmatprep.subr.mxu0 0.0
    %291 = vmatpush1.msra.mxu0 %v251
    %292 = vmatprep.subr.mxu0 0.0
    %293 = vmatpush1.msra.mxu0 %v250
    %294 = vmatprep.subr.mxu0 0.0
    %295 = vmatpush1.msra.mxu0 %v249
    %296 = vmatprep.subr.mxu0 0.0
    %297 = vmatpush1.msra.mxu0 %v248
    %298 = vmatprep.subr.mxu0 0.0
    %299 = vmatpush1.msra.mxu0 %v247
    %300 = vmatprep.subr.mxu0 0.0
    %301 = vmatpush1.msra.mxu0 %v246
    %302 = vmatprep.subr.mxu0 0.0
    %303 = vmatpush2.msra.mxu0 0.0
    %304 = vmatprep.subr.mxu0 0.0
    %305 = vmatpush2.msra.mxu0 0.0
    %306 = vmatprep.subr.mxu0 0.0
    %307 = vmatpush2.msra.mxu0 0.0
    %308 = vmatprep.subr.mxu0 0.0
    %309 = vmatpush2.msra.mxu0 0.0
    %310 = vmatprep.subr.mxu0 0.0
    %311 = vmatpush2.msra.mxu0 0.0
    %312 = vmatprep.subr.mxu0 0.0
    %313 = vmatpush2.msra.mxu0 0.0
    %314 = vmatprep.subr.mxu0 0.0
    %315 = vmatpush2.msra.mxu0 0.0
    %316 = vmatprep.subr.mxu0 0.0
    %317 = vmatpush2.msra.mxu0 0.0
    %318 = vmatprep.subr.mxu0 0.0
    %319 = vmatpush2.msra.mxu0 0.0
    %320 = vmatprep.subr.mxu0 0.0
    %321 = vmatpush2.msra.mxu0 0.0
    %322 = vmatprep.subr.mxu0 0.0
    %323 = vmatpush2.msra.mxu0 0.0
    %324 = vmatprep.subr.mxu0 0.0
    %325 = vmatpush2.msra.mxu0 0.0
    %326 = vmatprep.subr.mxu0 0.0
    %327 = vmatpush2.msra.mxu0 0.0
    %328 = vmatprep.subr.mxu0 0.0
    %329 = vmatpush2.msra.mxu0 0.0
    %330 = vmatprep.subr.mxu0 0.0
    %331 = vmatpush2.msra.mxu0 0.0
    %332 = vmatprep.subr.mxu0 0.0
    %333 = vmatpush2.msra.mxu0 0.0
    %334 = vmatprep.mubr.f32.mxu0 0.0
    %335 = vmatmul.mubr.f32.gmra.mxu0 %v244
    %v336 = vpop.f32.mrf.mxu0
    %v337 = vadd.f32 %v268, %v336
    %v338 = vpop.f32.mrf.mxu0
    %339 = vdwg.mxu0
    %v340 = vadd.f32 %v337, %v244
    %v341 = vmax.f32 %v340, 0.0
    %s342 = scalar_lea.vmem [#allocation5], 384
    %v343 = vld [vmem:[%s342] sm:$0xff]
    %v344 = vld [vmem:[%s342 + $0x8] sm:$0xff]
    %v345 = vld [vmem:[%s342 + $0x10] sm:$0xff]
    %v346 = vld [vmem:[%s342 + $0x18] sm:$0xff]
    %v347 = vld [vmem:[%s342 + $0x20] sm:$0xff]
    %v348 = vld [vmem:[%s342 + $0x28] sm:$0xff]
    %v349 = vld [vmem:[%s342 + $0x30] sm:$0xff]
    %v350 = vld [vmem:[%s342 + $0x38] sm:$0xff]
    %v351 = vld [vmem:[%s342 + $0x40] sm:$0xff]
    %v352 = vld [vmem:[%s342 + $0x48] sm:$0xff]
    %v353 = vld [vmem:[%s342 + $0x50] sm:$0xff]
    %v354 = vld [vmem:[%s342 + $0x58] sm:$0xff]
    %v355 = vld [vmem:[%s342 + $0x60] sm:$0xff]
    %v356 = vld [vmem:[%s342 + $0x68] sm:$0xff]
    %v357 = vld [vmem:[%s342 + $0x70] sm:$0xff]
    %v358 = vld [vmem:[%s342 + $0x78] sm:$0xff]
    %s359 = scalar_lea.vmem [#allocation7], 3
    %v360 = vld [vmem:[%s359] sm:$0x1]
    %v362 = vlaneseq
    %v363 = vshrl.u32 %v362, 7
    %v364 = vsub.s32 0, %v363
    %v365 = vrot.slane %v360, %v364
    %367 = vmatprep.subr.mxu0 0.0
    %368 = vmatpush1.msra.mxu0 %v358
    %369 = vmatprep.subr.mxu0 0.0
    %370 = vmatpush1.msra.mxu0 %v357
    %371 = vmatprep.subr.mxu0 0.0
    %372 = vmatpush1.msra.mxu0 %v356
    %373 = vmatprep.subr.mxu0 0.0
    %374 = vmatpush1.msra.mxu0 %v355
    %375 = vmatprep.subr.mxu0 0.0
    %376 = vmatpush1.msra.mxu0 %v354
    %377 = vmatprep.subr.mxu0 0.0
    %378 = vmatpush1.msra.mxu0 %v353
    %379 = vmatprep.subr.mxu0 0.0
    %380 = vmatpush1.msra.mxu0 %v352
    %381 = vmatprep.subr.mxu0 0.0
    %382 = vmatpush1.msra.mxu0 %v351
    %383 = vmatprep.subr.mxu0 0.0
    %384 = vmatpush1.msra.mxu0 %v350
    %385 = vmatprep.subr.mxu0 0.0
    %386 = vmatpush1.msra.mxu0 %v349
    %387 = vmatprep.subr.mxu0 0.0
    %388 = vmatpush1.msra.mxu0 %v348
    %389 = vmatprep.subr.mxu0 0.0
    %390 = vmatpush1.msra.mxu0 %v347
    %391 = vmatprep.subr.mxu0 0.0
    %392 = vmatpush1.msra.mxu0 %v346
    %393 = vmatprep.subr.mxu0 0.0
    %394 = vmatpush1.msra.mxu0 %v345
    %395 = vmatprep.subr.mxu0 0.0
    %396 = vmatpush1.msra.mxu0 %v344
    %397 = vmatprep.subr.mxu0 0.0
    %398 = vmatpush1.msra.mxu0 %v343
    %399 = vmatprep.subr.mxu0 0.0
    %400 = vmatpush2.msra.mxu0 0.0
    %401 = vmatprep.subr.mxu0 0.0
    %402 = vmatpush2.msra.mxu0 0.0
    %403 = vmatprep.subr.mxu0 0.0
    %404 = vmatpush2.msra.mxu0 0.0
    %405 = vmatprep.subr.mxu0 0.0
    %406 = vmatpush2.msra.mxu0 0.0
    %407 = vmatprep.subr.mxu0 0.0
    %408 = vmatpush2.msra.mxu0 0.0
    %409 = vmatprep.subr.mxu0 0.0
    %410 = vmatpush2.msra.mxu0 0.0
    %411 = vmatprep.subr.mxu0 0.0
    %412 = vmatpush2.msra.mxu0 0.0
    %413 = vmatprep.subr.mxu0 0.0
    %414 = vmatpush2.msra.mxu0 0.0
    %415 = vmatprep.subr.mxu0 0.0
    %416 = vmatpush2.msra.mxu0 0.0
    %417 = vmatprep.subr.mxu0 0.0
    %418 = vmatpush2.msra.mxu0 0.0
    %419 = vmatprep.subr.mxu0 0.0
    %420 = vmatpush2.msra.mxu0 0.0
    %421 = vmatprep.subr.mxu0 0.0
    %422 = vmatpush2.msra.mxu0 0.0
    %423 = vmatprep.subr.mxu0 0.0
    %424 = vmatpush2.msra.mxu0 0.0
    %425 = vmatprep.subr.mxu0 0.0
    %426 = vmatpush2.msra.mxu0 0.0
    %427 = vmatprep.subr.mxu0 0.0
    %428 = vmatpush2.msra.mxu0 0.0
    %429 = vmatprep.subr.mxu0 0.0
    %430 = vmatpush2.msra.mxu0 0.0
    %431 = vmatprep.mubr.f32.mxu0 0.0
    %432 = vmatmul.mubr.f32.gmra.mxu0 %v341
    %v433 = vpop.f32.mrf.mxu0
    %v434 = vadd.f32 %v365, %v433
    %v435 = vpop.f32.mrf.mxu0
    %436 = vdwg.mxu0
    %v437 = vmax.f32 %v434, 0.0
    %s438 = scalar_lea.vmem [#allocation5], 512
    %v439 = vld [vmem:[%s438] sm:$0xff]
    %v440 = vld [vmem:[%s438 + $0x8] sm:$0xff]
    %v441 = vld [vmem:[%s438 + $0x10] sm:$0xff]
    %v442 = vld [vmem:[%s438 + $0x18] sm:$0xff]
    %v443 = vld [vmem:[%s438 + $0x20] sm:$0xff]
    %v444 = vld [vmem:[%s438 + $0x28] sm:$0xff]
    %v445 = vld [vmem:[%s438 + $0x30] sm:$0xff]
    %v446 = vld [vmem:[%s438 + $0x38] sm:$0xff]
    %v447 = vld [vmem:[%s438 + $0x40] sm:$0xff]
    %v448 = vld [vmem:[%s438 + $0x48] sm:$0xff]
    %v449 = vld [vmem:[%s438 + $0x50] sm:$0xff]
    %v450 = vld [vmem:[%s438 + $0x58] sm:$0xff]
    %v451 = vld [vmem:[%s438 + $0x60] sm:$0xff]
    %v452 = vld [vmem:[%s438 + $0x68] sm:$0xff]
    %v453 = vld [vmem:[%s438 + $0x70] sm:$0xff]
    %v454 = vld [vmem:[%s438 + $0x78] sm:$0xff]
    %s455 = scalar_lea.vmem [#allocation7], 4
    %v456 = vld [vmem:[%s455] sm:$0x1]
    %v458 = vlaneseq
    %v459 = vshrl.u32 %v458, 7
    %v460 = vsub.s32 0, %v459
    %v461 = vrot.slane %v456, %v460
    %463 = vmatprep.subr.mxu0 0.0
    %464 = vmatpush1.msra.mxu0 %v454
    %465 = vmatprep.subr.mxu0 0.0
    %466 = vmatpush1.msra.mxu0 %v453
    %467 = vmatprep.subr.mxu0 0.0
    %468 = vmatpush1.msra.mxu0 %v452
    %469 = vmatprep.subr.mxu0 0.0
    %470 = vmatpush1.msra.mxu0 %v451
    %471 = vmatprep.subr.mxu0 0.0
    %472 = vmatpush1.msra.mxu0 %v450
    %473 = vmatprep.subr.mxu0 0.0
    %474 = vmatpush1.msra.mxu0 %v449
    %475 = vmatprep.subr.mxu0 0.0
    %476 = vmatpush1.msra.mxu0 %v448
    %477 = vmatprep.subr.mxu0 0.0
    %478 = vmatpush1.msra.mxu0 %v447
    %479 = vmatprep.subr.mxu0 0.0
    %480 = vmatpush1.msra.mxu0 %v446
    %481 = vmatprep.subr.mxu0 0.0
    %482 = vmatpush1.msra.mxu0 %v445
    %483 = vmatprep.subr.mxu0 0.0
    %484 = vmatpush1.msra.mxu0 %v444
    %485 = vmatprep.subr.mxu0 0.0
    %486 = vmatpush1.msra.mxu0 %v443
    %487 = vmatprep.subr.mxu0 0.0
    %488 = vmatpush1.msra.mxu0 %v442
    %489 = vmatprep.subr.mxu0 0.0
    %490 = vmatpush1.msra.mxu0 %v441
    %491 = vmatprep.subr.mxu0 0.0
    %492 = vmatpush1.msra.mxu0 %v440
    %493 = vmatprep.subr.mxu0 0.0
    %494 = vmatpush1.msra.mxu0 %v439
    %495 = vmatprep.subr.mxu0 0.0
    %496 = vmatpush2.msra.mxu0 0.0
    %497 = vmatprep.subr.mxu0 0.0
    %498 = vmatpush2.msra.mxu0 0.0
    %499 = vmatprep.subr.mxu0 0.0
    %500 = vmatpush2.msra.mxu0 0.0
    %501 = vmatprep.subr.mxu0 0.0
    %502 = vmatpush2.msra.mxu0 0.0
    %503 = vmatprep.subr.mxu0 0.0
    %504 = vmatpush2.msra.mxu0 0.0
    %505 = vmatprep.subr.mxu0 0.0
    %506 = vmatpush2.msra.mxu0 0.0
    %507 = vmatprep.subr.mxu0 0.0
    %508 = vmatpush2.msra.mxu0 0.0
    %509 = vmatprep.subr.mxu0 0.0
    %510 = vmatpush2.msra.mxu0 0.0
    %511 = vmatprep.subr.mxu0 0.0
    %512 = vmatpush2.msra.mxu0 0.0
    %513 = vmatprep.subr.mxu0 0.0
    %514 = vmatpush2.msra.mxu0 0.0
    %515 = vmatprep.subr.mxu0 0.0
    %516 = vmatpush2.msra.mxu0 0.0
    %517 = vmatprep.subr.mxu0 0.0
    %518 = vmatpush2.msra.mxu0 0.0
    %519 = vmatprep.subr.mxu0 0.0
    %520 = vmatpush2.msra.mxu0 0.0
    %521 = vmatprep.subr.mxu0 0.0
    %522 = vmatpush2.msra.mxu0 0.0
    %523 = vmatprep.subr.mxu0 0.0
    %524 = vmatpush2.msra.mxu0 0.0
    %525 = vmatprep.subr.mxu0 0.0
    %526 = vmatpush2.msra.mxu0 0.0
    %527 = vmatprep.mubr.f32.mxu0 0.0
    %528 = vmatmul.mubr.f32.gmra.mxu0 %v437
    %v529 = vpop.f32.mrf.mxu0
    %v530 = vadd.f32 %v461, %v529
    %v531 = vpop.f32.mrf.mxu0
    %532 = vdwg.mxu0
    %533 = vst [vmem:[#allocation8] sm:$0xff] %v530
    // Predicated region
    $region26: #{tpu_custom_call.1} parent=1 // pred_check
      _
    $region27: #{tpu_custom_call.1} parent=1 // pred_check_branch
      %535 = sbr.rel (0) target = $region29
    $region28: #{tpu_custom_call.1} parent=1 // pred_region
      %s537 = ssub.s32 128, 128
      %538 = vsyncadd [#allocation4], %s537
      %s540 = sshll.u32 [#allocation8], 4
      %s541 = int_to_ptr.vmem [resolvable:$true] %s540
      %543 = dma.vmem_to_hbm [thread:$0]  %s541, 128, %s3, [#allocation4]
    $region29: #{tpu_custom_call.1} parent=1 // pred_fallthru
      _
    // Predicated region
    $region30: #{tpu_custom_call.1} parent=1 // pred_check
      _
    $region31: #{tpu_custom_call.1} parent=1 // pred_check_branch
      %545 = sbr.rel (0) target = $region33
    $region32: #{tpu_custom_call.1} parent=1 // pred_region
      %546 = dma.done [#allocation4], 128
    $region33: #{tpu_custom_call.1} parent=1 // pred_fallthru
      _
    %547 = vsyncpa [#allocation3], 1
    %548 = vsyncpa [#allocation6], 1
    %549 = vsyncpa [#allocation4], 1

</llo_original>
